<compile_context>
chip_gen: v5e
topology: v5e:2x2
jax: 0.10.0
libtpu: 0.0.40
codegen_flags: <defaults>
</compile_context>

<pallas_src>
import functools

import jax
import jax.numpy as jnp
from jax.experimental import pallas as pl
from jax.experimental.pallas import tpu as pltpu


_MAX_ROW_TILE = 32768                 # cap per feedback (16K-32K rows)
_ONEHOT_BUDGET = 4 * 1024 * 1024      # bound on the (B, tile) one-hot intermediate


def _round_up(x, m):
    return ((x + m - 1) // m) * m


def _vmem_caps():
    """(x double-buffer budget, scoped vmem_limit_bytes) derived from the chip."""
    try:
        cap = int(pltpu.get_tpu_info().vmem_capacity_bytes)
    except Exception:  # conservative fallback if the query is unavailable
        cap = 128 * 1024 * 1024
    x_budget = cap // 4                      # 32 MiB on v5e/v6e, 16 MiB on v7x
    vmem_limit = min(cap // 2, 64 * 1024 * 1024)
    return x_budget, vmem_limit


def _pick_channel_tile(channels, itemsize):
    """Largest 128-multiple divisor (<=512) giving >=2 channel tiles with per-row
    DMA chunks >= 512 B; falls back to the (always legal) full channel extent."""
    if channels % 128 != 0:
        return channels
    for ct in (512, 384, 256, 128):
        if channels % ct == 0 and channels // ct >= 2 and ct * itemsize >= 512:
            return ct
    return channels


def _pick_row_tile(n_total, c_tile, itemsize, x_budget, batch_size):
    """Largest 128-multiple row tile whose double-buffered input block fits the
    VMEM budget (also bounding the (B, tile) one-hot intermediate)."""
    per_row = 2 * c_tile * itemsize                       # double-buffered x
    tile = (x_budget // per_row) // 128 * 128
    onehot_rows = max(8, _round_up(batch_size, 8))
    tile_oh = (_ONEHOT_BUDGET // (onehot_rows * 4)) // 128 * 128
    tile = max(128, min(tile, tile_oh, _MAX_ROW_TILE))
    if n_total <= tile:
        tile = max(8, _round_up(n_total, 8))              # single (possibly ragged) tile
    return tile


def _avg_pool_kernel(seg_ref, nv_ref, x_ref, o_ref, acc_ref, *, n_total, tile):
    """Segment-sum via a one-hot MXU matmul; divide by vertex count at finalize."""
    r = pl.program_id(1)
    batch_size = acc_ref.shape[0]
    last = pl.num_programs(1) - 1

    @pl.when(r == 0)
    def _init():
        acc_ref[...] = jnp.zeros_like(acc_ref)

    # (B, T) one-hot membership from the precomputed per-row segment ids.
    # Rows beyond n_total carry segment id == B, so they match no mesh.
    seg = seg_ref[...]                                                   # (1, T) int32
    one_hot = jax.lax.broadcasted_iota(jnp.int32, (batch_size, tile), 0) == seg

    def accumulate(x):
        if x.dtype == jnp.bfloat16:
            oh = one_hot.astype(jnp.bfloat16)      # native bf16 MXU path
        else:
            oh = one_hot.astype(jnp.float32)
            x = x.astype(jnp.float32)
        # Segment-sum of this tile: (B, T) @ (T, C_tile) -> (B, C_tile), f32 acc.
        acc_ref[...] += jnp.dot(oh, x, preferred_element_type=jnp.float32)

    valid_rows = n_total % tile
    if valid_rows == 0:
        accumulate(x_ref[...])
    else:
        @pl.when(r != last)
        def _full_tile():
            accumulate(x_ref[...])

        @pl.when(r == last)
        def _ragged_tail():
            # Zero garbage rows of the partial last block (0 * NaN would poison
            # the dot).  Only the last row tile pays this mask.
            rows = jax.lax.broadcasted_iota(jnp.int32, x_ref.shape, 0)
            xv = x_ref[...]
            accumulate(jnp.where(rows < valid_rows, xv, jnp.zeros_like(xv)))

    @pl.when(r == last)
    def _finalize():
        denom = jnp.maximum(nv_ref[...], 1.0)                            # (B, 1) f32
        o_ref[...] = (acc_ref[...] / denom).astype(o_ref.dtype)


def _max_pool_kernel(sb_ref, seg_ref, nv_ref, x_ref, o_ref, acc_ref):
    """Segment-max; data-dependent loop over only the segments present in tile."""
    r = pl.program_id(1)

    @pl.when(r == 0)
    def _init():
        acc_ref[...] = jnp.full_like(acc_ref, -jnp.inf)

    seg = seg_ref[...]                                                   # (T, 1) int32
    x = x_ref[...]                                                       # (T, C_tile)
    neg_inf = jnp.full_like(x, -jnp.inf)

    # Segments are contiguous, so a row tile typically intersects 1-2 meshes.
    seg_lo = sb_ref[0, r]
    seg_hi = sb_ref[1, r]

    def body(b, carry):
        mask_b = seg == b                                                # (T, 1) bool
        # Padded / garbage rows carry seg id == B, so they never match b and are
        # replaced by -inf before the reduce (no NaN leakage from the ragged tail).
        part = jnp.max(jnp.where(mask_b, x, neg_inf), axis=0, keepdims=True)
        cur = acc_ref[pl.ds(b, 1), :]
        acc_ref[pl.ds(b, 1), :] = jnp.maximum(cur, part.astype(jnp.float32))
        return carry

    jax.lax.fori_loop(seg_lo, seg_hi + 1, body, 0)

    @pl.when(r == pl.num_programs(1) - 1)
    def _finalize():
        # Empty meshes -> 0 (mirrors a zero-initialized scatter output for them).
        res = jnp.where(nv_ref[...] > 0.0, acc_ref[...], 0.0)
        o_ref[...] = res.astype(o_ref.dtype)


def global_pool_3d(inputs, nv_in, method="avg", row_tile=None, channel_tile=None):
    """Pallas implementation of GlobalPool3d.forward(inputs, nv_in)."""
    n_total, channels = inputs.shape
    batch_size = int(nv_in.shape[0])
    itemsize = jnp.dtype(inputs.dtype).itemsize

    if n_total == 0:
        return jnp.zeros((batch_size, channels), inputs.dtype)

    x_budget, vmem_limit = _vmem_caps()

    c_tile = channel_tile if channel_tile is not None else _pick_channel_tile(
        channels, itemsize)
    if channels % c_tile != 0:
        raise ValueError("channel_tile must divide the channel count.")
    n_ctiles = channels // c_tile

    tile = row_tile if row_tile is not None else _pick_row_tile(
        n_total, c_tile, itemsize, x_budget, batch_size)
    n_rtiles = max(1, pl.cdiv(n_total, tile))
    n_pad = n_rtiles * tile

    # Per-row segment id in [0, B]; rows >= n_total get id B (match no mesh).
    # Tiny int arrays -> no full (N, C) pad / copy of the feature tensor.
    nv_i32 = nv_in.astype(jnp.int32).reshape(batch_size)
    cum = jnp.cumsum(nv_i32)
    rows = jnp.arange(n_pad, dtype=jnp.int32)
    seg = jnp.searchsorted(cum, rows, side="right").astype(jnp.int32)    # (n_pad,)
    nv_col = nv_i32.astype(jnp.float32).reshape(batch_size, 1)

    bytes_accessed = (n_total + batch_size) * channels * itemsize + n_pad * 4

    if method == "avg":
        kernel = functools.partial(_avg_pool_kernel, n_total=n_total, tile=tile)
        seg_arr = seg.reshape(1, n_pad)            # lane-oriented: compare vs (B, T) iota
        grid_spec = pltpu.PrefetchScalarGridSpec(
            num_scalar_prefetch=0,
            grid=(n_ctiles, n_rtiles),             # row reduction axis is innermost
            in_specs=[
                pl.BlockSpec((1, tile), lambda c, r: (0, r)),
                pl.BlockSpec((batch_size, 1), lambda c, r: (0, 0)),
                pl.BlockSpec((tile, c_tile), lambda c, r: (r, c)),
            ],
            out_specs=pl.BlockSpec((batch_size, c_tile), lambda c, r: (0, c)),
            scratch_shapes=[pltpu.VMEM((batch_size, c_tile), jnp.float32)],
        )
        operands = (seg_arr, nv_col, inputs)
        flops = 2 * batch_size * n_pad * channels
    elif method == "max":
        kernel = _max_pool_kernel
        seg_arr = seg.reshape(n_pad, 1)            # sublane-oriented: per-row mask
        # Per-row-tile segment range [seg_lo, seg_hi] (long axis last for SMEM).
        starts = jnp.arange(n_rtiles, dtype=jnp.int32) * tile
        ends = jnp.minimum(starts + tile, n_total) - 1
        seg_lo = jnp.searchsorted(cum, starts, side="right").astype(jnp.int32)
        seg_hi = jnp.searchsorted(cum, ends, side="right").astype(jnp.int32)
        seg_bounds = jnp.stack([seg_lo, seg_hi], axis=0)                 # (2, n_rtiles)
        grid_spec = pltpu.PrefetchScalarGridSpec(
            num_scalar_prefetch=1,
            grid=(n_ctiles, n_rtiles),
            in_specs=[
                pl.BlockSpec((tile, 1), lambda c, r, sb: (r, 0)),
                pl.BlockSpec((batch_size, 1), lambda c, r, sb: (0, 0)),
                pl.BlockSpec((tile, c_tile), lambda c, r, sb: (r, c)),
            ],
            out_specs=pl.BlockSpec((batch_size, c_tile), lambda c, r, sb: (0, c)),
            scratch_shapes=[pltpu.VMEM((batch_size, c_tile), jnp.float32)],
        )
        operands = (seg_bounds, seg_arr, nv_col, inputs)
        flops = 2 * n_total * channels
    else:
        raise ValueError("Unknow pooling method %s." % method)

    return pl.pallas_call(
        kernel,
        out_shape=jax.ShapeDtypeStruct((batch_size, channels), inputs.dtype),
        grid_spec=grid_spec,
        compiler_params=pltpu.CompilerParams(
            # channel axis parallel (uses both v7x TCs), row reduction arbitrary
            dimension_semantics=("parallel", "arbitrary"),
            vmem_limit_bytes=vmem_limit,
        ),
        cost_estimate=pl.CostEstimate(
            flops=int(flops), transcendentals=0, bytes_accessed=int(bytes_accessed)),
    )(*operands)


if __name__ == "__main__":
    k_a, k_b, _ = jax.random.split(jax.random.PRNGKey(0), 3)

    def _reference(x, nv, method):
        b = nv.shape[0]
        seg_ids = jnp.repeat(jnp.arange(b), nv, total_repeat_length=x.shape[0])
        if method == "avg":
            s = jax.ops.segment_sum(x, seg_ids, num_segments=b)
            return s / jnp.maximum(nv.astype(jnp.float32), 1.0)[:, None]
        m = jax.ops.segment_max(x, seg_ids, num_segments=b)
        return jnp.where(nv[:, None] > 0, m, 0.0)

    # --- Test A: small f32 batch (B=2, C=32), auto tile sizes -----------------
    nv_a = jnp.array([5, 11], dtype=jnp.int32)
    n_a = int(nv_a.sum())
    x_a = jax.random.normal(k_a, (n_a, 32), dtype=jnp.float32)

    out = jax.block_until_ready(global_pool_3d(x_a, nv_a, method="avg"))
    assert out.shape == (2, 32)
    assert jnp.allclose(out, _reference(x_a, nv_a, "avg"), atol=1e-4, rtol=1e-4)

    out = jax.block_until_ready(global_pool_3d(x_a, nv_a, method="max"))
    assert jnp.allclose(out, _reference(x_a, nv_a, "max"), atol=1e-6, rtol=1e-6)

    # --- Test B: multi row & channel tiles, partial last block, empty mesh ----
    nv_b = jnp.array([200, 0, 313], dtype=jnp.int32)
    n_b = int(nv_b.sum())
    x_b = jax.random.normal(k_b, (n_b, 256), dtype=jnp.float32)

    out = jax.block_until_ready(
        global_pool_3d(x_b, nv_b, method="avg", row_tile=128, channel_tile=128))
    assert jnp.allclose(out, _reference(x_b, nv_b, "avg"), atol=1e-4, rtol=1e-4)

    out = jax.block_until_ready(
        global_pool_3d(x_b, nv_b, method="max", row_tile=128, channel_tile=128))
    assert jnp.allclose(out, _reference(x_b, nv_b, "max"), atol=1e-6, rtol=1e-6)

    # --- Test C: bf16 inputs (exercises the bf16 MXU path) --------------------
    x_c = x_a.astype(jnp.bfloat16)
    out = jax.block_until_ready(global_pool_3d(x_c, nv_a, method="avg"))
    ref = _reference(x_c.astype(jnp.float32), nv_a, "avg")
    assert jnp.allclose(out.astype(jnp.float32), ref, atol=2e-2, rtol=2e-2)

    out = jax.block_until_ready(global_pool_3d(x_c, nv_a, method="max"))
    ref = _reference(x_c.astype(jnp.float32), nv_a, "max")
    assert jnp.allclose(out.astype(jnp.float32), ref, atol=1e-6, rtol=1e-6)

    print("KERNEL_OK")
</pallas_src>

<mosaic_0001>
module attributes {stable_mosaic.version = 11 : i64} {
  func.func @_avg_pool_kernel(%arg0: i32, %arg1: i32, %arg2: memref<1x16xi32, #tpu.memory_space<vmem>>, %arg3: memref<2x1xf32, #tpu.memory_space<vmem>>, %arg4: memref<16x32xf32, #tpu.memory_space<vmem>>, %arg5: memref<2x32xf32, #tpu.memory_space<vmem>>, %arg6: memref<2x32xf32, #tpu.memory_space<vmem>>) attributes {dimension_semantics = [#tpu.dimension_semantics<parallel>, #tpu.dimension_semantics<arbitrary>], iteration_bounds = array<i64: 1, 1>, scalar_prefetch = 0 : i64, scratch_operands = 1 : i64, tpu.core_type = #tpu.core_type<tc>, window_params = [{transform_indices = @transform_0, window_bounds = array<i64: 1, 16>}, {pipeline_mode = #tpu.pipeline_mode<synchronous>, transform_indices = @transform_1, window_bounds = array<i64: 2, 1>}, {transform_indices = @transform_2, window_bounds = array<i64: 16, 32>}, {transform_indices = @transform_3, window_bounds = array<i64: 2, 32>}]} {
    %c0_i32 = arith.constant 0 : i32
    %0 = arith.cmpi eq, %arg1, %c0_i32 : i32
    %1 = arith.extui %0 : i1 to i32
    %c0_i32_0 = arith.constant 0 : i32
    %2 = arith.cmpi ne, %1, %c0_i32_0 : i32
    scf.if %2 {
      %cst_10 = arith.constant 0.000000e+00 : f32
      %17 = vector.broadcast %cst_10 : f32 to vector<2x32xf32>
      %c0_11 = arith.constant 0 : index
      %c0_12 = arith.constant 0 : index
      %18 = vector.load %arg6[%c0_11, %c0_12] : memref<2x32xf32, #tpu.memory_space<vmem>>, vector<2x32xf32>
      tpu.vector_store %arg6[%c0_11, %c0_12], %17 {strides = array<i32>} : memref<2x32xf32, #tpu.memory_space<vmem>>, vector<2x32xf32>,
    } else {
    }
    %c0 = arith.constant 0 : index
    %c0_1 = arith.constant 0 : index
    %3 = vector.load %arg2[%c0, %c0_1] : memref<1x16xi32, #tpu.memory_space<vmem>>, vector<1x16xi32>
    %4 = tpu.iota {dimensions = array<i32: 0>} : vector<2x16xi32>
    %5 = vector.broadcast %3 : vector<1x16xi32> to vector<2x16xi32>
    %6 = arith.cmpi eq, %4, %5 : vector<2x16xi32>
    %c0_2 = arith.constant 0 : index
    %c0_3 = arith.constant 0 : index
    %7 = vector.load %arg4[%c0_2, %c0_3] : memref<16x32xf32, #tpu.memory_space<vmem>>, vector<16x32xf32>
    %8 = arith.extui %6 : vector<2x16xi1> to vector<2x16xi32>
    %9 = arith.sitofp %8 : vector<2x16xi32> to vector<2x16xf32>
    %c0_4 = arith.constant 0 : index
    %c0_5 = arith.constant 0 : index
    %10 = vector.load %arg6[%c0_4, %c0_5] : memref<2x32xf32, #tpu.memory_space<vmem>>, vector<2x32xf32>
    %cst = arith.constant dense<0.000000e+00> : vector<2x32xf32>
    %11 = tpu.matmul %9, %7, %cst {dimension_numbers = #tpu.dot_dimension_numbers<[1], [0], [0], [1], [0, 0, 1, 1], [], []>} : vector<2x16xf32>, vector<16x32xf32>, vector<2x32xf32> -> vector<2x32xf32>
    %12 = arith.addf %10, %11 : vector<2x32xf32>
    %c0_6 = arith.constant 0 : index
    %c0_7 = arith.constant 0 : index
    %13 = vector.load %arg6[%c0_6, %c0_7] : memref<2x32xf32, #tpu.memory_space<vmem>>, vector<2x32xf32>
    tpu.vector_store %arg6[%c0_6, %c0_7], %12 {strides = array<i32>} : memref<2x32xf32, #tpu.memory_space<vmem>>, vector<2x32xf32>,
    %c0_i32_8 = arith.constant 0 : i32
    %14 = arith.cmpi eq, %arg1, %c0_i32_8 : i32
    %15 = arith.extui %14 : i1 to i32
    %c0_i32_9 = arith.constant 0 : i32
    %16 = arith.cmpi ne, %15, %c0_i32_9 : i32
    scf.if %16 {
      %c0_10 = arith.constant 0 : index
      %c0_11 = arith.constant 0 : index
      %17 = vector.load %arg3[%c0_10, %c0_11] : memref<2x1xf32, #tpu.memory_space<vmem>>, vector<2x1xf32>
      %cst_12 = arith.constant 1.000000e+00 : f32
      %18 = vector.broadcast %cst_12 : f32 to vector<2x1xf32>
      %19 = arith.maximumf %17, %18 : vector<2x1xf32>
      %c0_13 = arith.constant 0 : index
      %c0_14 = arith.constant 0 : index
      %20 = vector.load %arg6[%c0_13, %c0_14] : memref<2x32xf32, #tpu.memory_space<vmem>>, vector<2x32xf32>
      %21 = vector.broadcast %19 : vector<2x1xf32> to vector<2x32xf32>
      %22 = arith.divf %20, %21 : vector<2x32xf32>
      %c0_15 = arith.constant 0 : index
      %c0_16 = arith.constant 0 : index
      %23 = vector.load %arg5[%c0_15, %c0_16] : memref<2x32xf32, #tpu.memory_space<vmem>>, vector<2x32xf32>
      tpu.vector_store %arg5[%c0_15, %c0_16], %22 {strides = array<i32>} : memref<2x32xf32, #tpu.memory_space<vmem>>, vector<2x32xf32>,
    } else {
    }
    return
  }
  func.func @transform_0(%arg0: i32, %arg1: i32) -> (i32, i32) {
    %c0_i32 = arith.constant 0 : i32
    %c0_i32_0 = arith.constant 0 : i32
    return %c0_i32, %arg1 : i32, i32
  }
  func.func @transform_1(%arg0: i32, %arg1: i32) -> (i32, i32) {
    %c0_i32 = arith.constant 0 : i32
    %c0_i32_0 = arith.constant 0 : i32
    %c0_i32_1 = arith.constant 0 : i32
    return %c0_i32, %c0_i32_0 : i32, i32
  }
  func.func @transform_2(%arg0: i32, %arg1: i32) -> (i32, i32) {
    %c0_i32 = arith.constant 0 : i32
    return %arg1, %arg0 : i32, i32
  }
  func.func @transform_3(%arg0: i32, %arg1: i32) -> (i32, i32) {
    %c0_i32 = arith.constant 0 : i32
    %c0_i32_0 = arith.constant 0 : i32
    return %c0_i32, %arg0 : i32, i32
  }
}

</mosaic_0001>

<llo_original>
// kernel: tpu_custom_call.1
$region0: #{tpu_custom_call.1}
  #allocation0 [shape = 'u32[]', space=smem, size = 0x4, offset = 0x4, fixed_abs, tag = 'smem constant byte address 0x4 - core index']
  #allocation1 [shape = 'u32[72,128]{1,0:T(1,128)}', space=vmem, size = 0x9000, scoped, tag = 'internal scratch']
  #allocation2 [shape = 'f32[2,32]{1,0:T(2,128)}', space=vmem, size = 0x400, scoped, tag = 'scratch operand']
  %s0 = inlined_call_operand.vmem [shape: s32[1,16], index: 0, kind: input, shape index: {}]
  %s1 = inlined_call_operand.vmem [shape: f32[2,1], index: 1, kind: input, shape index: {}]
  %s2 = inlined_call_operand.hbm [shape: f32[16,32], index: 2, kind: input, shape index: {}]
  %s3 = inlined_call_operand.hbm [shape: f32[2,32], index: 3, kind: output, shape index: {}]
  %s4 = sld [smem:[#allocation0]]
  $region34: #{tpu_custom_call.1} parent=0
    _
  %s6 = ssub.s32 1, %s4
  %s7 = scalar_select 0, %s6, %s4
  $region1: #{tpu_custom_call.1} parent=0
    #allocation3 [shape = 'u8[8192]{0}', space=vmem, size = 0x2000, scoped, tag = 'input window, operand 2, single buffered']
    #allocation4 [shape = 's32[1]{0}', space=sflag, size = 0x4, scoped, tag = 'scoped memory for tpu_custom_call.1']
    #allocation5 [shape = 's32[1]{0}', space=sflag, size = 0x4, scoped, tag = 'scoped memory for tpu_custom_call.1']
    #allocation6 [shape = 'u8[1024]{0}', space=vmem, size = 0x400, scoped, tag = 'output window, operand 0, single buffered']
    %8 = vsyncpa [#allocation4], 0
    %9 = vsyncpa [#allocation5], 0
    // Predicated region
    $region2: #{tpu_custom_call.1} parent=1 // pred_check
      _
    $region3: #{tpu_custom_call.1} parent=1 // pred_check_branch
      %11 = sbr.rel (0) target = $region5
    $region4: #{tpu_custom_call.1} parent=1 // pred_region
      _
    $region5: #{tpu_custom_call.1} parent=1 // pred_fallthru
      _
    // Predicated region
    $region6: #{tpu_custom_call.1} parent=1 // pred_check
      _
    $region7: #{tpu_custom_call.1} parent=1 // pred_check_branch
      %13 = sbr.rel (0) target = $region9
    $region8: #{tpu_custom_call.1} parent=1 // pred_region
      _
    $region9: #{tpu_custom_call.1} parent=1 // pred_fallthru
      _
    // Predicated region
    $region10: #{tpu_custom_call.1} parent=1 // pred_check
      _
    $region11: #{tpu_custom_call.1} parent=1 // pred_check_branch
      %15 = sbr.rel (0) target = $region13
    $region12: #{tpu_custom_call.1} parent=1 // pred_region
      %17 = vsyncadd [#allocation4], 0
      %s18 = sshll.u32 %s2, 4
      %s19 = int_to_ptr.hbm [resolvable:$true] %s18
      %s20 = sshll.u32 [#allocation3], 4
      %s21 = int_to_ptr.vmem [resolvable:$true] %s20
      %26 = dma.hbm_to_vmem [thread:$0]  %s19, 256, %s21, [#allocation4], 128, 128, 8
    $region13: #{tpu_custom_call.1} parent=1 // pred_fallthru
      _
    // Predicated region
    $region14: #{tpu_custom_call.1} parent=1 // pred_check
      _
    $region15: #{tpu_custom_call.1} parent=1 // pred_check_branch
      %28 = sbr.rel (0) target = $region17
    $region16: #{tpu_custom_call.1} parent=1 // pred_region
      %30 = dma.done [#allocation4], 256
    $region17: #{tpu_custom_call.1} parent=1 // pred_fallthru
      _
    %p31 = scmp.eq.s32.totalorder 0, 0
    // Predicated region
    $region18: #{tpu_custom_call.1} parent=1 // pred_check
      %p32 = pneg %p31
    $region19: #{tpu_custom_call.1} parent=1 // pred_check_branch
      %34 = sbr.rel (%p32) target = $region21
    $region20: #{tpu_custom_call.1} parent=1 // pred_region
      %vm35 = vcmask 254976
      %36 = vst.msk [vmem:[#allocation2] sm:$0x3] %vm35, 0.0
    $region21: #{tpu_custom_call.1} parent=1 // pred_fallthru
      _
    %v37 = vld [vmem:[%s0] sm:$0x1]
    %v38 = vlaneseq
    %v39 = vshrl.u32 %v38, 7
    %v40 = vperm.slane %v37, 0
    %vm41 = vcmp.eq.s32.totalorder %v39, %v40
    %v42 = vld [vmem:[#allocation3] sm:$0xff]
    %v43 = vld [vmem:[#allocation3 + $0x8] sm:$0xff]
    %v44 = vsel %vm41, 1, 0
    %v45 = vcvt.s32.f32 %v44
    %v46 = vld [vmem:[#allocation2] sm:$0x3]
    %vm47 = vcmask 130048
    %v49 = vsel %vm47, %v45, 0
    %51 = vmatpush.msra.mxu0 0.0
    %52 = vmatpush.msra.mxu0 0.0
    %53 = vmatpush.msra.mxu0 0.0
    %54 = vmatpush.msra.mxu0 0.0
    %55 = vmatpush.msra.mxu0 0.0
    %56 = vmatpush.msra.mxu0 0.0
    %57 = vmatpush.msra.mxu0 0.0
    %58 = vmatpush.msra.mxu0 0.0
    %59 = vmatpush.msra.mxu0 0.0
    %60 = vmatpush.msra.mxu0 0.0
    %61 = vmatpush.msra.mxu0 0.0
    %62 = vmatpush.msra.mxu0 0.0
    %63 = vmatpush.msra.mxu0 0.0
    %64 = vmatpush.msra.mxu0 0.0
    %65 = vmatpush.msra.mxu0 %v43
    %66 = vmatpush.msra.mxu0 %v42
    %67 = vmatmul.f32.gmra.mxu0 %v49
    %v68 = vpop.f32.mrf.mxu0
    %v69 = vadd.f32 0.0, %v68
    %70 = vdwg.mxu0
    %v71 = vadd.f32 %v46, %v69
    %vm72 = vcmask 254976
    %73 = vst.msk [vmem:[#allocation2] sm:$0x3] %vm72, %v71
    // Predicated region
    $region22: #{tpu_custom_call.1} parent=1 // pred_check
      %p74 = pneg %p31
    $region23: #{tpu_custom_call.1} parent=1 // pred_check_branch
      %76 = sbr.rel (%p74) target = $region25
    $region24: #{tpu_custom_call.1} parent=1 // pred_region
      %v77 = vld [vmem:[%s1] sm:$0x3]
      %v78 = vmax.f32 %v77, 1.0
      %v79 = vld [vmem:[#allocation2] sm:$0x3]
      %81 = vset.pattern.permute.xlu0 0
      %82 = vperm.xlu0 %81, %v78
      %v83 = vpop.permute.xlu0 %82
      %v85 = vrcp.pop %v83
      %v86 = vmul.f32 %v83, %v85
      %v87 = vsub.f32 1.0, %v86
      %v88 = vmul.f32 %v85, %v87
      %v89 = vadd.f32 %v85, %v88
      %vm90 = vweird.f32 %v83
      %vm91 = vweird.f32 %v85
      %vm92 = vmor %vm90, %vm91
      %v93 = vsel %vm92, %v85, %v89
      %v94 = vand.u32 2147483647, %v83
      %vm95 = vcmp.eq.f32.partialorder %v94, 8.507059e+37
      %v96 = vand.u32 %v83, 2147483648
      %v97 = vor.u32 1.1754944e-38, %v96
      %v98 = vsel %vm95, %v97, %v93
      %v99 = vmul.f32 %v79, %v98
      %100 = vst.msk [vmem:[#allocation6] sm:$0x3] %vm72, %v99
    $region25: #{tpu_custom_call.1} parent=1 // pred_fallthru
      _
    // Predicated region
    $region26: #{tpu_custom_call.1} parent=1 // pred_check
      _
    $region27: #{tpu_custom_call.1} parent=1 // pred_check_branch
      %102 = sbr.rel (0) target = $region29
    $region28: #{tpu_custom_call.1} parent=1 // pred_region
      %104 = vsyncadd [#allocation5], 0
      %s106 = sshll.u32 [#allocation6], 4
      %s107 = int_to_ptr.vmem [resolvable:$true] %s106
      %s108 = sshll.u32 %s3, 4
      %s109 = int_to_ptr.hbm [resolvable:$true] %s108
      %111 = dma.vmem_to_hbm [thread:$0]  %s107, 32, %s109, [#allocation5]
    $region29: #{tpu_custom_call.1} parent=1 // pred_fallthru
      _
    // Predicated region
    $region30: #{tpu_custom_call.1} parent=1 // pred_check
      _
    $region31: #{tpu_custom_call.1} parent=1 // pred_check_branch
      %113 = sbr.rel (0) target = $region33
    $region32: #{tpu_custom_call.1} parent=1 // pred_region
      %115 = dma.done [#allocation5], 32
    $region33: #{tpu_custom_call.1} parent=1 // pred_fallthru
      _
    %116 = vsyncpa [#allocation4], 1
    %117 = vsyncpa [#allocation5], 1

</llo_original>
